<compile_context>
chip_gen: v7x
topology: tpu7x:2x2x1
jax: 0.10.0
libtpu: 0.0.40
codegen_flags: <defaults>
</compile_context>

<pallas_src>
import functools

import jax
import jax.numpy as jnp
from jax.experimental import pallas as pl
from jax.experimental.pallas import tpu as pltpu


def _round_up(x, m):
    return (x + m - 1) // m * m


def _pad2(a, rows, cols):
    return jnp.pad(a, ((0, rows - a.shape[0]), (0, cols - a.shape[1])))


def _compiler_params(dimension_semantics, need_bytes):
    """Generation-aware VMEM limit: cap under physical VMEM minus headroom."""
    try:
        cap = int(pltpu.get_tpu_info().vmem_capacity_bytes)
    except Exception:
        cap = 64 * 2**20          # conservative (v7x-sized) fallback
    limit = int(min(cap - 8 * 2**20, max(32 * 2**20, 2 * int(need_bytes))))
    return pltpu.CompilerParams(dimension_semantics=dimension_semantics,
                                vmem_limit_bytes=limit)


# ---------------- kernel 1: h = relu((A_hat @ z) @ W1 + b1) ------------------

def _conv1_kernel(tk, ahat_ref, z_ref, w1_ref, b1_ref, h_ref, acc_ref):
    k = pl.program_id(1)

    @pl.when(k == 0)
    def _():
        acc_ref[...] = jnp.zeros_like(acc_ref)

    z_blk = z_ref[pl.ds(pl.multiple_of(k * tk, tk), tk), :]
    acc_ref[...] += jnp.dot(ahat_ref[...], z_blk,
                            preferred_element_type=jnp.float32)

    @pl.when(k == pl.num_programs(1) - 1)
    def _():
        h = jnp.dot(acc_ref[...].astype(jnp.bfloat16), w1_ref[...],
                    preferred_element_type=jnp.float32) + b1_ref[...]
        h_ref[...] = jnp.maximum(h, 0.0).astype(h_ref.dtype)


# ------ kernel 2: emb = (A_hat @ h) @ [W_A|W_X] + [b_A|b_X]; split/sigmoid ---

def _conv2_kernel(tk, latent_pad, ahat_ref, h_ref, wcat_ref, bcat_ref,
                  x_ref, aemb_ref, acc_ref):
    k = pl.program_id(1)

    @pl.when(k == 0)
    def _():
        acc_ref[...] = jnp.zeros_like(acc_ref)

    h_blk = h_ref[pl.ds(pl.multiple_of(k * tk, tk), tk), :]
    acc_ref[...] += jnp.dot(ahat_ref[...], h_blk,
                            preferred_element_type=jnp.float32)

    @pl.when(k == pl.num_programs(1) - 1)
    def _():
        emb = jnp.dot(acc_ref[...].astype(jnp.bfloat16), wcat_ref[...],
                      preferred_element_type=jnp.float32) + bcat_ref[...]
        x_emb = emb[:, latent_pad:]
        # sigmoid via EUP exp + approx reciprocal (frees VALU slots).
        x_ref[...] = pl.reciprocal(1.0 + jnp.exp(-x_emb),
                                   approx=True).astype(x_ref.dtype)
        aemb_ref[...] = emb[:, :latent_pad].astype(aemb_ref.dtype)


# ------- kernel 3: per-edge scores sigmoid(<a_emb[src_e], a_emb[dst_e]>) -----

def _edge_score_kernel(aemb_ref, src_ref, dst_ref, out_ref):
    n_pad = aemb_ref.shape[0]
    te = src_ref.shape[1]
    a_emb = aemb_ref[...]                                        # (Np, Lp) bf16
    node_iota = jax.lax.broadcasted_iota(jnp.int32, (n_pad, te), 0)
    # One-hot selection masks built directly in bf16 (no f32 intermediate).
    sel_src = (node_iota == src_ref[...]).astype(jnp.bfloat16)   # (Np, TE)
    sel_dst = (node_iota == dst_ref[...]).astype(jnp.bfloat16)
    dn = (((0,), (0,)), ((), ()))                                # contract nodes
    g_src = jax.lax.dot_general(a_emb, sel_src, dn,
                                preferred_element_type=jnp.float32)  # (Lp, TE)
    g_dst = jax.lax.dot_general(a_emb, sel_dst, dn,
                                preferred_element_type=jnp.float32)
    logits = jnp.sum(g_src * g_dst, axis=0, keepdims=True)           # (1, TE)
    out_ref[...] = pl.reciprocal(1.0 + jnp.exp(-logits), approx=True)


# ------------------------------- wrapper -------------------------------------

def _gcn_norm(edge_index, num_nodes):
    """Dense D^{-1/2} (A + I) D^{-1/2}, matching torch_geometric GCNConv norm."""
    src, dst = edge_index[0], edge_index[1]
    loop = jnp.arange(num_nodes, dtype=src.dtype)
    src = jnp.concatenate([src, loop])
    dst = jnp.concatenate([dst, loop])
    adj = jnp.zeros((num_nodes, num_nodes), jnp.float32).at[dst, src].add(1.0)
    deg = adj.sum(axis=1)
    dinv = jnp.where(deg > 0, jax.lax.rsqrt(deg), 0.0)
    return dinv[:, None] * adj * dinv[None, :]


def init_generator_params(key, latent_dim, hidden_channels, output_channels):
    k1, k2, k3 = jax.random.split(key, 3)

    def glorot(k, fan_in, fan_out):
        scale = jnp.sqrt(6.0 / (fan_in + fan_out))
        return jax.random.uniform(k, (fan_in, fan_out), jnp.float32, -scale, scale)

    return {
        "w1": glorot(k1, latent_dim, hidden_channels),
        "b1": jnp.zeros((1, hidden_channels), jnp.float32),
        "wA": glorot(k2, hidden_channels, latent_dim),
        "bA": jnp.zeros((1, latent_dim), jnp.float32),
        "wX": glorot(k3, hidden_channels, output_channels),
        "bX": jnp.zeros((1, output_channels), jnp.float32),
    }


def generator_forward(params, z, edge_index, *, dropout=True, seed=0):
    """Returns (x, A) like Generator.forward: x (N, output_channels), A (E,)."""
    n_nodes, latent_dim = z.shape
    hidden = params["w1"].shape[1]
    out_ch = params["wX"].shape[1]
    src, dst = edge_index[0], edge_index[1]
    n_edges = src.shape[0]

    # torch.dropout(z, p=0.5, train=True): drop w.p. 0.5, scale kept by 2.
    # NOTE: fixed PRNGKey(seed) -> identical mask whenever seed repeats.
    if dropout:
        keep = jax.random.bernoulli(jax.random.PRNGKey(seed), 0.5, z.shape)
        z = jnp.where(keep, z * 2.0, 0.0)

    a_hat = _gcn_norm(edge_index, n_nodes)

    # Padded sizes: channels to 128-lane multiples, nodes to the A_hat tile,
    # edges to the edge-block width.  Zero padding is exact and sliced off.
    np_ = _round_up(n_nodes, 256)
    tile = 512 if np_ % 512 == 0 else 256        # A_hat tile (TM = TK)
    te = 256                                     # edges per grid step
    lp = _round_up(latent_dim, 128)
    hp = _round_up(hidden, 128)
    op = _round_up(out_ch, 128)
    ep = _round_up(n_edges, te)
    nb = np_ // tile

    z_p = _pad2(z, np_, lp).astype(jnp.bfloat16)
    ahat_p = _pad2(a_hat, np_, np_).astype(jnp.bfloat16)
    w1_p = _pad2(params["w1"], lp, hp).astype(jnp.bfloat16)
    b1_p = _pad2(params["b1"], 1, hp)
    wcat_p = jnp.concatenate(
        [_pad2(params["wA"], hp, lp), _pad2(params["wX"], hp, op)],
        axis=1).astype(jnp.bfloat16)
    bcat_p = jnp.concatenate(
        [_pad2(params["bA"], 1, lp), _pad2(params["bX"], 1, op)], axis=1)
    src_p = jnp.zeros((1, ep), jnp.int32).at[0, :n_edges].set(src.astype(jnp.int32))
    dst_p = jnp.zeros((1, ep), jnp.int32).at[0, :n_edges].set(dst.astype(jnp.int32))

    # ---- pass 1: h = relu((A_hat @ z) @ W1 + b1) -----------------------------
    k1_need = (4 * tile * tile + 2 * np_ * lp + 2 * lp * hp + 4 * hp
               + 4 * tile * hp + 4 * tile * lp + 4 * tile * hp)
    h_p = pl.pallas_call(
        functools.partial(_conv1_kernel, tile),
        out_shape=jax.ShapeDtypeStruct((np_, hp), jnp.bfloat16),
        grid=(nb, nb),
        in_specs=[
            pl.BlockSpec((tile, tile), lambda i, k: (i, k)),    # A_hat (stream)
            pl.BlockSpec((np_, lp), lambda i, k: (0, 0)),       # z (resident)
            pl.BlockSpec((lp, hp), lambda i, k: (0, 0)),        # W1
            pl.BlockSpec((1, hp), lambda i, k: (0, 0)),         # b1
        ],
        out_specs=pl.BlockSpec((tile, hp), lambda i, k: (i, 0)),
        scratch_shapes=[pltpu.VMEM((tile, lp), jnp.float32)],
        compiler_params=_compiler_params(("parallel", "arbitrary"), k1_need),
        cost_estimate=pl.CostEstimate(
            flops=int(2 * np_ * np_ * lp + 2 * np_ * lp * hp),
            transcendentals=0,
            bytes_accessed=int(2 * np_ * np_ + 2 * np_ * (lp + hp)
                               + 2 * lp * hp + 4 * hp)),
    )(ahat_p, z_p, w1_p, b1_p)

    # ---- pass 2: emb = (A_hat @ h) @ [W_A|W_X] + [b_A|b_X] -------------------
    k2_need = (4 * tile * tile + 2 * np_ * hp + 2 * hp * (lp + op)
               + 4 * (lp + op) + 8 * tile * op + 4 * tile * lp
               + 4 * tile * hp + 4 * tile * (lp + op))
    x_p, aemb_p = pl.pallas_call(
        functools.partial(_conv2_kernel, tile, lp),
        out_shape=(
            jax.ShapeDtypeStruct((np_, op), jnp.float32),
            jax.ShapeDtypeStruct((np_, lp), jnp.bfloat16),
        ),
        grid=(nb, nb),
        in_specs=[
            pl.BlockSpec((tile, tile), lambda i, k: (i, k)),    # A_hat (stream)
            pl.BlockSpec((np_, hp), lambda i, k: (0, 0)),       # h (resident)
            pl.BlockSpec((hp, lp + op), lambda i, k: (0, 0)),   # [W_A|W_X]
            pl.BlockSpec((1, lp + op), lambda i, k: (0, 0)),    # [b_A|b_X]
        ],
        out_specs=(
            pl.BlockSpec((tile, op), lambda i, k: (i, 0)),      # sigmoid(conv_X)
            pl.BlockSpec((tile, lp), lambda i, k: (i, 0)),      # conv_A embedding
        ),
        scratch_shapes=[pltpu.VMEM((tile, hp), jnp.float32)],
        compiler_params=_compiler_params(("parallel", "arbitrary"), k2_need),
        cost_estimate=pl.CostEstimate(
            flops=int(2 * np_ * np_ * hp + 2 * np_ * hp * (lp + op)),
            transcendentals=int(np_ * op),
            bytes_accessed=int(2 * np_ * np_ + 2 * np_ * hp + 2 * hp * (lp + op)
                               + 4 * np_ * op + 2 * np_ * lp)),
    )(ahat_p, h_p, wcat_p, bcat_p)

    # ---- pass 3: per-edge scores, tiled over edge blocks ---------------------
    k3_need = (2 * np_ * lp + 12 * np_ * te + 8 * lp * te + 24 * te)
    a_p = pl.pallas_call(
        _edge_score_kernel,
        out_shape=jax.ShapeDtypeStruct((1, ep), jnp.float32),
        grid=(ep // te,),
        in_specs=[
            pl.BlockSpec((np_, lp), lambda e: (0, 0)),          # a_emb (resident)
            pl.BlockSpec((1, te), lambda e: (0, e)),            # src block
            pl.BlockSpec((1, te), lambda e: (0, e)),            # dst block
        ],
        out_specs=pl.BlockSpec((1, te), lambda e: (0, e)),      # lane-dense out
        compiler_params=_compiler_params(("parallel",), k3_need),
        cost_estimate=pl.CostEstimate(
            flops=int(4 * np_ * lp * ep + 2 * lp * ep),
            transcendentals=int(ep),
            bytes_accessed=int(2 * np_ * lp + 12 * ep)),
    )(aemb_p, src_p, dst_p)

    return x_p[:n_nodes, :out_ch], a_p[0, :n_edges]


if __name__ == "__main__":
    # Small shapes consistent with the module (latent -> hidden -> output GCNs).
    LATENT_DIM = 32
    HIDDEN_CHANNELS = 64
    OUTPUT_CHANNELS = 128
    N_NODES = 16
    N_EDGES = 24

    key = jax.random.PRNGKey(0)
    k_param, k_z, k_src, k_dst = jax.random.split(key, 4)

    params = init_generator_params(k_param, LATENT_DIM, HIDDEN_CHANNELS,
                                   OUTPUT_CHANNELS)
    z = jax.random.normal(k_z, (N_NODES, LATENT_DIM), jnp.float32)
    edge_index = jnp.stack([
        jax.random.randint(k_src, (N_EDGES,), 0, N_NODES, dtype=jnp.int32),
        jax.random.randint(k_dst, (N_EDGES,), 0, N_NODES, dtype=jnp.int32),
    ])

    x, A = generator_forward(params, z, edge_index, dropout=True, seed=0)
    x = jax.block_until_ready(x)
    A = jax.block_until_ready(A)

    assert x.shape == (N_NODES, OUTPUT_CHANNELS)
    assert A.shape == (N_EDGES,)
    assert bool(jnp.all((x >= 0.0) & (x <= 1.0 + 1e-3)))
    assert bool(jnp.all((A >= 0.0) & (A <= 1.0 + 1e-3)))
    assert bool(jnp.all(jnp.isfinite(x))) and bool(jnp.all(jnp.isfinite(A)))

    # Deterministic (no-dropout) path checked against a pure-JAX f32 reference.
    x_nd, A_nd = generator_forward(params, z, edge_index, dropout=False)
    jax.block_until_ready((x_nd, A_nd))
    assert x_nd.shape == (N_NODES, OUTPUT_CHANNELS) and A_nd.shape == (N_EDGES,)

    a_hat_fp = _gcn_norm(edge_index, N_NODES)
    h_fp = jax.nn.relu(a_hat_fp @ (z @ params["w1"]) + params["b1"])
    aemb_fp = a_hat_fp @ (h_fp @ params["wA"]) + params["bA"]
    x_fp = jax.nn.sigmoid(a_hat_fp @ (h_fp @ params["wX"]) + params["bX"])
    A_fp = jax.nn.sigmoid(
        jnp.sum(aemb_fp[edge_index[0]] * aemb_fp[edge_index[1]], axis=1))
    assert float(jnp.max(jnp.abs(x_nd - x_fp))) < 5e-2
    assert float(jnp.max(jnp.abs(A_nd - A_fp))) < 5e-2

    print("KERNEL_OK")
</pallas_src>

<mosaic_0001>
module attributes {stable_mosaic.version = 11 : i64} {
  func.func @_conv1_kernel(%arg0: i32, %arg1: i32, %arg2: memref<256x256xbf16, #tpu.memory_space<vmem>>, %arg3: memref<256x128xbf16, #tpu.memory_space<vmem>>, %arg4: memref<128x128xbf16, #tpu.memory_space<vmem>>, %arg5: memref<1x128xf32, #tpu.memory_space<vmem>>, %arg6: memref<256x128xbf16, #tpu.memory_space<vmem>>, %arg7: memref<256x128xf32, #tpu.memory_space<vmem>>) attributes {dimension_semantics = [#tpu.dimension_semantics<parallel>, #tpu.dimension_semantics<arbitrary>], iteration_bounds = array<i64: 1, 1>, scalar_prefetch = 0 : i64, scratch_operands = 1 : i64, tpu.core_type = #tpu.core_type<tc>, window_params = [{transform_indices = @transform_0, window_bounds = array<i64: 256, 256>}, {pipeline_mode = #tpu.pipeline_mode<synchronous>, transform_indices = @transform_1, window_bounds = array<i64: 256, 128>}, {pipeline_mode = #tpu.pipeline_mode<synchronous>, transform_indices = @transform_2, window_bounds = array<i64: 128, 128>}, {pipeline_mode = #tpu.pipeline_mode<synchronous>, transform_indices = @transform_3, window_bounds = array<i64: 1, 128>}, {transform_indices = @transform_4, window_bounds = array<i64: 256, 128>}]} {
    %c0_i32 = arith.constant 0 : i32
    %0 = arith.cmpi eq, %arg1, %c0_i32 : i32
    %1 = arith.extui %0 : i1 to i32
    %c0_i32_0 = arith.constant 0 : i32
    %2 = arith.cmpi ne, %1, %c0_i32_0 : i32
    scf.if %2 {
      %cst_9 = arith.constant 0.000000e+00 : f32
      %15 = vector.broadcast %cst_9 : f32 to vector<256x128xf32>
      %c0_10 = arith.constant 0 : index
      %c0_11 = arith.constant 0 : index
      %16 = vector.load %arg7[%c0_10, %c0_11] : memref<256x128xf32, #tpu.memory_space<vmem>>, vector<256x128xf32>
      tpu.vector_store %arg7[%c0_10, %c0_11], %15 {strides = array<i32>} : memref<256x128xf32, #tpu.memory_space<vmem>>, vector<256x128xf32>,
    } else {
    }
    %c256_i32 = arith.constant 256 : i32
    %3 = arith.muli %arg1, %c256_i32 : i32
    %4 = tpu.assume_multiple %3, 256 : i32
    %5 = arith.index_cast %4 : i32 to index
    %c0 = arith.constant 0 : index
    %6 = vector.load %arg3[%5, %c0] : memref<256x128xbf16, #tpu.memory_space<vmem>>, vector<256x128xbf16>
    %c0_1 = arith.constant 0 : index
    %c0_2 = arith.constant 0 : index
    %7 = vector.load %arg7[%c0_1, %c0_2] : memref<256x128xf32, #tpu.memory_space<vmem>>, vector<256x128xf32>
    %c0_3 = arith.constant 0 : index
    %c0_4 = arith.constant 0 : index
    %8 = vector.load %arg2[%c0_3, %c0_4] : memref<256x256xbf16, #tpu.memory_space<vmem>>, vector<256x256xbf16>
    %cst = arith.constant dense<0.000000e+00> : vector<256x128xf32>
    %9 = tpu.matmul %8, %6, %cst {dimension_numbers = #tpu.dot_dimension_numbers<[1], [0], [0], [1], [0, 0, 1, 1], [], []>} : vector<256x256xbf16>, vector<256x128xbf16>, vector<256x128xf32> -> vector<256x128xf32>
    %10 = arith.addf %7, %9 : vector<256x128xf32>
    %c0_5 = arith.constant 0 : index
    %c0_6 = arith.constant 0 : index
    %11 = vector.load %arg7[%c0_5, %c0_6] : memref<256x128xf32, #tpu.memory_space<vmem>>, vector<256x128xf32>
    tpu.vector_store %arg7[%c0_5, %c0_6], %10 {strides = array<i32>} : memref<256x128xf32, #tpu.memory_space<vmem>>, vector<256x128xf32>,
    %c0_i32_7 = arith.constant 0 : i32
    %12 = arith.cmpi eq, %arg1, %c0_i32_7 : i32
    %13 = arith.extui %12 : i1 to i32
    %c0_i32_8 = arith.constant 0 : i32
    %14 = arith.cmpi ne, %13, %c0_i32_8 : i32
    scf.if %14 {
      %c0_9 = arith.constant 0 : index
      %c0_10 = arith.constant 0 : index
      %15 = vector.load %arg7[%c0_9, %c0_10] : memref<256x128xf32, #tpu.memory_space<vmem>>, vector<256x128xf32>
      %16 = arith.truncf %15 : vector<256x128xf32> to vector<256x128xbf16>
      %c0_11 = arith.constant 0 : index
      %c0_12 = arith.constant 0 : index
      %17 = vector.load %arg4[%c0_11, %c0_12] : memref<128x128xbf16, #tpu.memory_space<vmem>>, vector<128x128xbf16>
      %cst_13 = arith.constant dense<0.000000e+00> : vector<256x128xf32>
      %18 = tpu.matmul %16, %17, %cst_13 {dimension_numbers = #tpu.dot_dimension_numbers<[1], [0], [0], [1], [0, 0, 1, 1], [], []>} : vector<256x128xbf16>, vector<128x128xbf16>, vector<256x128xf32> -> vector<256x128xf32>
      %c0_14 = arith.constant 0 : index
      %c0_15 = arith.constant 0 : index
      %19 = vector.load %arg5[%c0_14, %c0_15] : memref<1x128xf32, #tpu.memory_space<vmem>>, vector<1x128xf32>
      %20 = vector.broadcast %19 : vector<1x128xf32> to vector<256x128xf32>
      %21 = arith.addf %18, %20 : vector<256x128xf32>
      %cst_16 = arith.constant 0.000000e+00 : f32
      %22 = vector.broadcast %cst_16 : f32 to vector<256x128xf32>
      %23 = arith.maximumf %21, %22 : vector<256x128xf32>
      %24 = arith.truncf %23 : vector<256x128xf32> to vector<256x128xbf16>
      %c0_17 = arith.constant 0 : index
      %c0_18 = arith.constant 0 : index
      %25 = vector.load %arg6[%c0_17, %c0_18] : memref<256x128xbf16, #tpu.memory_space<vmem>>, vector<256x128xbf16>
      tpu.vector_store %arg6[%c0_17, %c0_18], %24 {strides = array<i32>} : memref<256x128xbf16, #tpu.memory_space<vmem>>, vector<256x128xbf16>,
    } else {
    }
    return
  }
  func.func @transform_0(%arg0: i32, %arg1: i32) -> (i32, i32) {
    %c0_i32 = arith.constant 0 : i32
    return %arg0, %arg1 : i32, i32
  }
  func.func @transform_1(%arg0: i32, %arg1: i32) -> (i32, i32) {
    %c0_i32 = arith.constant 0 : i32
    %c0_i32_0 = arith.constant 0 : i32
    %c0_i32_1 = arith.constant 0 : i32
    return %c0_i32, %c0_i32_0 : i32, i32
  }
  func.func @transform_2(%arg0: i32, %arg1: i32) -> (i32, i32) {
    %c0_i32 = arith.constant 0 : i32
    %c0_i32_0 = arith.constant 0 : i32
    %c0_i32_1 = arith.constant 0 : i32
    return %c0_i32, %c0_i32_0 : i32, i32
  }
  func.func @transform_3(%arg0: i32, %arg1: i32) -> (i32, i32) {
    %c0_i32 = arith.constant 0 : i32
    %c0_i32_0 = arith.constant 0 : i32
    %c0_i32_1 = arith.constant 0 : i32
    return %c0_i32, %c0_i32_0 : i32, i32
  }
  func.func @transform_4(%arg0: i32, %arg1: i32) -> (i32, i32) {
    %c0_i32 = arith.constant 0 : i32
    %c0_i32_0 = arith.constant 0 : i32
    return %arg0, %c0_i32 : i32, i32
  }
}

</mosaic_0001>

<llo_original>
// kernel: tpu_custom_call.1
$region0: #{tpu_custom_call.1}
  #allocation0 [shape = 'u32[]', space=smem, size = 0x4, offset = 0x4, fixed_abs, tag = 'smem constant byte address 0x4 - core index']
  #allocation1 [shape = 'u32[144,128]{1,0:T(1,128)}', space=vmem, size = 0x12000, scoped, tag = 'internal scratch']
  #allocation2 [shape = 'f32[256,128]{1,0:T(8,128)}', space=vmem, size = 0x20000, scoped, tag = 'scratch operand']
  %s0 = inlined_call_operand.hbm [shape: bf16[256,256], index: 0, kind: input, shape index: {}]
  %s1 = inlined_call_operand.hbm [shape: bf16[256,128], index: 1, kind: input, shape index: {}]
  %s2 = inlined_call_operand.hbm [shape: bf16[128,128], index: 2, kind: input, shape index: {}]
  %s3 = inlined_call_operand.vmem [shape: f32[1,128], index: 3, kind: input, shape index: {}]
  %s4 = inlined_call_operand.hbm [shape: bf16[256,128], index: 4, kind: output, shape index: {}]
  %s5 = sld [smem:[#allocation0]]
  $region46: #{tpu_custom_call.1} parent=0
    _
  %s7 = ssub.s32 1, %s5
  %s8 = scalar_select 0, %s7, %s5
  $region1: #{tpu_custom_call.1} parent=0
    #allocation3 [shape = 'u8[131072]{0}', space=vmem, size = 0x20000, scoped, tag = 'input window, operand 0, single buffered']
    #allocation4 [shape = 's32[1]{0}', space=sflag, size = 0x4, scoped, tag = 'scoped memory for tpu_custom_call.1']
    #allocation5 [shape = 's32[1]{0}', space=sflag, size = 0x4, scoped, tag = 'scoped memory for tpu_custom_call.1']
    #allocation6 [shape = 'u8[65536]{0}', space=vmem, size = 0x10000, scoped, tag = 'input window, operand 1, single buffered']
    #allocation7 [shape = 's32[1]{0}', space=sflag, size = 0x4, scoped, tag = 'scoped memory for tpu_custom_call.1']
    #allocation8 [shape = 'u8[32768]{0}', space=vmem, size = 0x8000, scoped, tag = 'input window, operand 2, single buffered']
    #allocation9 [shape = 'u8[65536]{0}', space=vmem, size = 0x10000, scoped, tag = 'output window, operand 0, single buffered']
    %9 = vsyncpa [#allocation4], 0
    %10 = vsyncpa [#allocation7], 0
    %11 = vsyncpa [#allocation5], 0
    // Predicated region
    $region2: #{tpu_custom_call.1} parent=1 // pred_check
      _
    $region3: #{tpu_custom_call.1} parent=1 // pred_check_branch
      %13 = sbr.rel (0) target = $region5
    $region4: #{tpu_custom_call.1} parent=1 // pred_region
      %s15 = ssub.s32 4096, 4096
      %16 = vsyncadd [#allocation4], %s15
      %s17 = sshll.u32 [#allocation3], 4
      %s18 = int_to_ptr.vmem [resolvable:$true] %s17
      %23 = dma.hbm_to_vmem [thread:$0]  %s0, 4096, %s18, [#allocation4], 128, 128, 8
    $region5: #{tpu_custom_call.1} parent=1 // pred_fallthru
      _
    // Predicated region
    $region6: #{tpu_custom_call.1} parent=1 // pred_check
      _
    $region7: #{tpu_custom_call.1} parent=1 // pred_check_branch
      %25 = sbr.rel (0) target = $region9
    $region8: #{tpu_custom_call.1} parent=1 // pred_region
      %s27 = ssub.s32 2048, 2048
      %28 = vsyncadd [#allocation7], %s27
      %s29 = sshll.u32 [#allocation6], 4
      %s30 = int_to_ptr.vmem [resolvable:$true] %s29
      %35 = dma.hbm_to_vmem [thread:$0]  %s1, 2048, %s30, [#allocation7], 64, 64, 4
    $region9: #{tpu_custom_call.1} parent=1 // pred_fallthru
      _
    // Predicated region
    $region10: #{tpu_custom_call.1} parent=1 // pred_check
      _
    $region11: #{tpu_custom_call.1} parent=1 // pred_check_branch
      %37 = sbr.rel (0) target = $region13
    $region12: #{tpu_custom_call.1} parent=1 // pred_region
      %s39 = ssub.s32 1024, 1024
      %40 = vsyncadd [#allocation7], %s39
      %s41 = sshll.u32 [#allocation8], 4
      %s42 = int_to_ptr.vmem [resolvable:$true] %s41
      %47 = dma.hbm_to_vmem [thread:$0]  %s2, 1024, %s42, [#allocation7], 64, 64, 4
    $region13: #{tpu_custom_call.1} parent=1 // pred_fallthru
      _
    // Predicated region
    $region14: #{tpu_custom_call.1} parent=1 // pred_check
      _
    $region15: #{tpu_custom_call.1} parent=1 // pred_check_branch
      %49 = sbr.rel (0) target = $region17
    $region16: #{tpu_custom_call.1} parent=1 // pred_region
      _
    $region17: #{tpu_custom_call.1} parent=1 // pred_fallthru
      _
    // Predicated region
    $region18: #{tpu_custom_call.1} parent=1 // pred_check
      _
    $region19: #{tpu_custom_call.1} parent=1 // pred_check_branch
      %51 = sbr.rel (0) target = $region21
    $region20: #{tpu_custom_call.1} parent=1 // pred_region
      %52 = dma.done [#allocation4], 4096
    $region21: #{tpu_custom_call.1} parent=1 // pred_fallthru
      _
    // Predicated region
    $region22: #{tpu_custom_call.1} parent=1 // pred_check
      _
    $region23: #{tpu_custom_call.1} parent=1 // pred_check_branch
      %54 = sbr.rel (0) target = $region25
    $region24: #{tpu_custom_call.1} parent=1 // pred_region
      %55 = dma.done [#allocation7], 2048
    $region25: #{tpu_custom_call.1} parent=1 // pred_fallthru
      _
    // Predicated region
    $region26: #{tpu_custom_call.1} parent=1 // pred_check
      _
    $region27: #{tpu_custom_call.1} parent=1 // pred_check_branch
      %57 = sbr.rel (0) target = $region29
    $region28: #{tpu_custom_call.1} parent=1 // pred_region
      %58 = dma.done [#allocation7], 1024
    $region29: #{tpu_custom_call.1} parent=1 // pred_fallthru
      _
    %p60 = scmp.eq.s32.totalorder 0, 0
    // Predicated region
    $region30: #{tpu_custom_call.1} parent=1 // pred_check
      %p61 = pneg %p60
    $region31: #{tpu_custom_call.1} parent=1 // pred_check_branch
      %63 = sbr.rel (%p61) target = $region33
    $region32: #{tpu_custom_call.1} parent=1 // pred_region
      %64 = vst [vmem:[#allocation2] sm:$0xff] 0.0
      %65 = vst [vmem:[#allocation2 + $0x8] sm:$0xff] 0.0
      %66 = vst [vmem:[#allocation2 + $0x10] sm:$0xff] 0.0
      %67 = vst [vmem:[#allocation2 + $0x18] sm:$0xff] 0.0
      %68 = vst [vmem:[#allocation2 + $0x20] sm:$0xff] 0.0
      %69 = vst [vmem:[#allocation2 + $0x28] sm:$0xff] 0.0
      %70 = vst [vmem:[#allocation2 + $0x30] sm:$0xff] 0.0
      %71 = vst [vmem:[#allocation2 + $0x38] sm:$0xff] 0.0
      %72 = vst [vmem:[#allocation2 + $0x40] sm:$0xff] 0.0
      %73 = vst [vmem:[#allocation2 + $0x48] sm:$0xff] 0.0
      %74 = vst [vmem:[#allocation2 + $0x50] sm:$0xff] 0.0
      %75 = vst [vmem:[#allocation2 + $0x58] sm:$0xff] 0.0
      %76 = vst [vmem:[#allocation2 + $0x60] sm:$0xff] 0.0
      %77 = vst [vmem:[#allocation2 + $0x68] sm:$0xff] 0.0
      %78 = vst [vmem:[#allocation2 + $0x70] sm:$0xff] 0.0
      %79 = vst [vmem:[#allocation2 + $0x78] sm:$0xff] 0.0
      %80 = vst [vmem:[#allocation2 + $0x80] sm:$0xff] 0.0
      %81 = vst [vmem:[#allocation2 + $0x88] sm:$0xff] 0.0
      %82 = vst [vmem:[#allocation2 + $0x90] sm:$0xff] 0.0
      %83 = vst [vmem:[#allocation2 + $0x98] sm:$0xff] 0.0
      %84 = vst [vmem:[#allocation2 + $0xa0] sm:$0xff] 0.0
      %85 = vst [vmem:[#allocation2 + $0xa8] sm:$0xff] 0.0
      %86 = vst [vmem:[#allocation2 + $0xb0] sm:$0xff] 0.0
      %87 = vst [vmem:[#allocation2 + $0xb8] sm:$0xff] 0.0
      %88 = vst [vmem:[#allocation2 + $0xc0] sm:$0xff] 0.0
      %89 = vst [vmem:[#allocation2 + $0xc8] sm:$0xff] 0.0
      %90 = vst [vmem:[#allocation2 + $0xd0] sm:$0xff] 0.0
      %91 = vst [vmem:[#allocation2 + $0xd8] sm:$0xff] 0.0
      %92 = vst [vmem:[#allocation2 + $0xe0] sm:$0xff] 0.0
      %93 = vst [vmem:[#allocation2 + $0xe8] sm:$0xff] 0.0
      %94 = vst [vmem:[#allocation2 + $0xf0] sm:$0xff] 0.0
      %95 = vst [vmem:[#allocation2 + $0xf8] sm:$0xff] 0.0
    $region33: #{tpu_custom_call.1} parent=1 // pred_fallthru
      _
    %s96 = smul.u32 0, 256
    %s97 = sshra.s32 %s96, 3
    %s98 = sand.u32 %s96, 7
    %s99 = smul.addr %s97, 4
    %s100 = scalar_lea.vmem [#allocation6], %s99
    %v101 = vld [vmem:[%s100] sm:$0xf]
    %v102 = vld [vmem:[%s100 + $0x4] sm:$0xf]
    %v103 = vld [vmem:[%s100 + $0x8] sm:$0xf]
    %v104 = vld [vmem:[%s100 + $0xc] sm:$0xf]
    %v105 = vld [vmem:[%s100 + $0x10] sm:$0xf]
    %v106 = vld [vmem:[%s100 + $0x14] sm:$0xf]
    %v107 = vld [vmem:[%s100 + $0x18] sm:$0xf]
    %v108 = vld [vmem:[%s100 + $0x1c] sm:$0xf]
    %v109 = vld [vmem:[%s100 + $0x20] sm:$0xf]
    %v110 = vld [vmem:[%s100 + $0x24] sm:$0xf]
    %v111 = vld [vmem:[%s100 + $0x28] sm:$0xf]
    %v112 = vld [vmem:[%s100 + $0x2c] sm:$0xf]
    %v113 = vld [vmem:[%s100 + $0x30] sm:$0xf]
    %v114 = vld [vmem:[%s100 + $0x34] sm:$0xf]
    %v115 = vld [vmem:[%s100 + $0x38] sm:$0xf]
    %v116 = vld [vmem:[%s100 + $0x3c] sm:$0xf]
    %v117 = vld [vmem:[%s100 + $0x40] sm:$0xf]
    %v118 = vld [vmem:[%s100 + $0x44] sm:$0xf]
    %v119 = vld [vmem:[%s100 + $0x48] sm:$0xf]
    %v120 = vld [vmem:[%s100 + $0x4c] sm:$0xf]
    %v121 = vld [vmem:[%s100 + $0x50] sm:$0xf]
    %v122 = vld [vmem:[%s100 + $0x54] sm:$0xf]
    %v123 = vld [vmem:[%s100 + $0x58] sm:$0xf]
    %v124 = vld [vmem:[%s100 + $0x5c] sm:$0xf]
    %v125 = vld [vmem:[%s100 + $0x60] sm:$0xf]
    %v126 = vld [vmem:[%s100 + $0x64] sm:$0xf]
    %v127 = vld [vmem:[%s100 + $0x68] sm:$0xf]
    %v128 = vld [vmem:[%s100 + $0x6c] sm:$0xf]
    %v129 = vld [vmem:[%s100 + $0x70] sm:$0xf]
    %v130 = vld [vmem:[%s100 + $0x74] sm:$0xf]
    %v131 = vld [vmem:[%s100 + $0x78] sm:$0xf]
    %v132 = vld [vmem:[%s100 + $0x7c] sm:$0xf]
    %v133 = vld [vmem:[#allocation2] sm:$0xff]
    %v134 = vld [vmem:[#allocation2 + $0x8] sm:$0xff]
    %v135 = vld [vmem:[#allocation2 + $0x10] sm:$0xff]
    %v136 = vld [vmem:[#allocation2 + $0x18] sm:$0xff]
    %v137 = vld [vmem:[#allocation2 + $0x20] sm:$0xff]
    %v138 = vld [vmem:[#allocation2 + $0x28] sm:$0xff]
    %v139 = vld [vmem:[#allocation2 + $0x30] sm:$0xff]
    %v140 = vld [vmem:[#allocation2 + $0x38] sm:$0xff]
    %v141 = vld [vmem:[#allocation2 + $0x40] sm:$0xff]
    %v142 = vld [vmem:[#allocation2 + $0x48] sm:$0xff]
    %v143 = vld [vmem:[#allocation2 + $0x50] sm:$0xff]
    %v144 = vld [vmem:[#allocation2 + $0x58] sm:$0xff]
    %v145 = vld [vmem:[#allocation2 + $0x60] sm:$0xff]
    %v146 = vld [vmem:[#allocation2 + $0x68] sm:$0xff]
    %v147 = vld [vmem:[#allocation2 + $0x70] sm:$0xff]
    %v148 = vld [vmem:[#allocation2 + $0x78] sm:$0xff]
    %v149 = vld [vmem:[#allocation2 + $0x80] sm:$0xff]
    %v150 = vld [vmem:[#allocation2 + $0x88] sm:$0xff]
    %v151 = vld [vmem:[#allocation2 + $0x90] sm:$0xff]
    %v152 = vld [vmem:[#allocation2 + $0x98] sm:$0xff]
    %v153 = vld [vmem:[#allocation2 + $0xa0] sm:$0xff]
    %v154 = vld [vmem:[#allocation2 + $0xa8] sm:$0xff]
    %v155 = vld [vmem:[#allocation2 + $0xb0] sm:$0xff]
    %v156 = vld [vmem:[#allocation2 + $0xb8] sm:$0xff]
    %v157 = vld [vmem:[#allocation2 + $0xc0] sm:$0xff]
    %v158 = vld [vmem:[#allocation2 + $0xc8] sm:$0xff]
    %v159 = vld [vmem:[#allocation2 + $0xd0] sm:$0xff]
    %v160 = vld [vmem:[#allocation2 + $0xd8] sm:$0xff]
    %v161 = vld [vmem:[#allocation2 + $0xe0] sm:$0xff]
    %v162 = vld [vmem:[#allocation2 + $0xe8] sm:$0xff]
    %v163 = vld [vmem:[#allocation2 + $0xf0] sm:$0xff]
    %v164 = vld [vmem:[#allocation2 + $0xf8] sm:$0xff]
    %v165 = vld [vmem:[#allocation3] sm:$0xff]
    %v166 = vld [vmem:[#allocation3 + $0x8] sm:$0xff]
    %v167 = vld [vmem:[#allocation3 + $0x10] sm:$0xff]
    %v168 = vld [vmem:[#allocation3 + $0x18] sm:$0xff]
    %v169 = vld [vmem:[#allocation3 + $0x20] sm:$0xff]
    %v170 = vld [vmem:[#allocation3 + $0x28] sm:$0xff]
    %v171 = vld [vmem:[#allocation3 + $0x30] sm:$0xff]
    %v172 = vld [vmem:[#allocation3 + $0x38] sm:$0xff]
    %v173 = vld [vmem:[#allocation3 + $0x40] sm:$0xff]
    %v174 = vld [vmem:[#allocation3 + $0x48] sm:$0xff]
    %v175 = vld [vmem:[#allocation3 + $0x50] sm:$0xff]
    %v176 = vld [vmem:[#allocation3 + $0x58] sm:$0xff]
    %v177 = vld [vmem:[#allocation3 + $0x60] sm:$0xff]
    %v178 = vld [vmem:[#allocation3 + $0x68] sm:$0xff]
    %v179 = vld [vmem:[#allocation3 + $0x70] sm:$0xff]
    %v180 = vld [vmem:[#allocation3 + $0x78] sm:$0xff]
    %v181 = vld [vmem:[#allocation3 + $0x80] sm:$0xff]
    %v182 = vld [vmem:[#allocation3 + $0x88] sm:$0xff]
    %v183 = vld [vmem:[#allocation3 + $0x90] sm:$0xff]
    %v184 = vld [vmem:[#allocation3 + $0x98] sm:$0xff]
    %v185 = vld [vmem:[#allocation3 + $0xa0] sm:$0xff]
    %v186 = vld [vmem:[#allocation3 + $0xa8] sm:$0xff]
    %v187 = vld [vmem:[#allocation3 + $0xb0] sm:$0xff]
    %v188 = vld [vmem:[#allocation3 + $0xb8] sm:$0xff]
    %v189 = vld [vmem:[#allocation3 + $0xc0] sm:$0xff]
    %v190 = vld [vmem:[#allocation3 + $0xc8] sm:$0xff]
    %v191 = vld [vmem:[#allocation3 + $0xd0] sm:$0xff]
    %v192 = vld [vmem:[#allocation3 + $0xd8] sm:$0xff]
    %v193 = vld [vmem:[#allocation3 + $0xe0] sm:$0xff]
    %v194 = vld [vmem:[#allocation3 + $0xe8] sm:$0xff]
    %v195 = vld [vmem:[#allocation3 + $0xf0] sm:$0xff]
    %v196 = vld [vmem:[#allocation3 + $0xf8] sm:$0xff]
    %v229 = vunpack.c.l.b16 %v165
    %v230 = vunpack.c.h.b16 %v165
    %v231 = vunpack.c.l.b16 %v166
    %v232 = vunpack.c.h.b16 %v166
    %v233 = vunpack.c.l.b16 %v167
    %v234 = vunpack.c.h.b16 %v167
    %v235 = vunpack.c.l.b16 %v168
    %v236 = vunpack.c.h.b16 %v168
    %v237 = vunpack.c.l.b16 %v169
    %v238 = vunpack.c.h.b16 %v169
    %v239 = vunpack.c.l.b16 %v170
    %v240 = vunpack.c.h.b16 %v170
    %v241 = vunpack.c.l.b16 %v171
    %v242 = vunpack.c.h.b16 %v171
    %v243 = vunpack.c.l.b16 %v172
    %v244 = vunpack.c.h.b16 %v172
    %v245 = vunpack.c.l.b16 %v173
    %v246 = vunpack.c.h.b16 %v173
    %v247 = vunpack.c.l.b16 %v174
    %v248 = vunpack.c.h.b16 %v174
    %v249 = vunpack.c.l.b16 %v175
    %v250 = vunpack.c.h.b16 %v175
    %v251 = vunpack.c.l.b16 %v176
    %v252 = vunpack.c.h.b16 %v176
    %v253 = vunpack.c.l.b16 %v177
    %v254 = vunpack.c.h.b16 %v177
    %v255 = vunpack.c.l.b16 %v178
    %v256 = vunpack.c.h.b16 %v178
    %v257 = vunpack.c.l.b16 %v179
    %v258 = vunpack.c.h.b16 %v179
    %v259 = vunpack.c.l.b16 %v180
    %v260 = vunpack.c.h.b16 %v180
    %v261 = vunpack.c.l.b16 %v181
    %v262 = vunpack.c.h.b16 %v181
    %v263 = vunpack.c.l.b16 %v182
    %v264 = vunpack.c.h.b16 %v182
    %v265 = vunpack.c.l.b16 %v183
    %v266 = vunpack.c.h.b16 %v183
    %v267 = vunpack.c.l.b16 %v184
    %v268 = vunpack.c.h.b16 %v184
    %v269 = vunpack.c.l.b16 %v185
    %v270 = vunpack.c.h.b16 %v185
    %v271 = vunpack.c.l.b16 %v186
    %v272 = vunpack.c.h.b16 %v186
    %v273 = vunpack.c.l.b16 %v187
    %v274 = vunpack.c.h.b16 %v187
    %v275 = vunpack.c.l.b16 %v188
    %v276 = vunpack.c.h.b16 %v188
    %v277 = vunpack.c.l.b16 %v189
    %v278 = vunpack.c.h.b16 %v189
    %v279 = vunpack.c.l.b16 %v190
    %v280 = vunpack.c.h.b16 %v190
    %v281 = vunpack.c.l.b16 %v191
    %v282 = vunpack.c.h.b16 %v191
    %v283 = vunpack.c.l.b16 %v192
    %v284 = vunpack.c.h.b16 %v192
    %v285 = vunpack.c.l.b16 %v193
    %v286 = vunpack.c.h.b16 %v193
    %v287 = vunpack.c.l.b16 %v194
    %v288 = vunpack.c.h.b16 %v194
    %v289 = vunpack.c.l.b16 %v195
    %v290 = vunpack.c.h.b16 %v195
    %v291 = vunpack.c.l.b16 %v196
    %v292 = vunpack.c.h.b16 %v196
    %v293 = vpack.c.b16 %v231, %v229
    %v294 = vpack.c.b16 %v232, %v230
    %v295 = vpack.c.b16 %v235, %v233
    %v296 = vpack.c.b16 %v236, %v234
    %v297 = vpack.c.b16 %v239, %v237
    %v298 = vpack.c.b16 %v240, %v238
    %v299 = vpack.c.b16 %v243, %v241
    %v300 = vpack.c.b16 %v244, %v242
    %v301 = vpack.c.b16 %v247, %v245
    %v302 = vpack.c.b16 %v248, %v246
    %v303 = vpack.c.b16 %v251, %v249
    %v304 = vpack.c.b16 %v252, %v250
    %v305 = vpack.c.b16 %v255, %v253
    %v306 = vpack.c.b16 %v256, %v254
    %v307 = vpack.c.b16 %v259, %v257
    %v308 = vpack.c.b16 %v260, %v258
    %v309 = vpack.c.b16 %v263, %v261
    %v310 = vpack.c.b16 %v264, %v262
    %v311 = vpack.c.b16 %v267, %v265
    %v312 = vpack.c.b16 %v268, %v266
    %v313 = vpack.c.b16 %v271, %v269
    %v314 = vpack.c.b16 %v272, %v270
    %v315 = vpack.c.b16 %v275, %v273
    %v316 = vpack.c.b16 %v276, %v274
    %v317 = vpack.c.b16 %v279, %v277
    %v318 = vpack.c.b16 %v280, %v278
    %v319 = vpack.c.b16 %v283, %v281
    %v320 = vpack.c.b16 %v284, %v282
    %v321 = vpack.c.b16 %v287, %v285
    %v322 = vpack.c.b16 %v288, %v286
    %v323 = vpack.c.b16 %v291, %v289
    %v324 = vpack.c.b16 %v292, %v290
    %v389 = vunpack.c.l.b16 %v101
    %v390 = vunpack.c.l.b16 %v102
    %v391 = vunpack.c.l.b16 %v103
    %v392 = vunpack.c.l.b16 %v104
    %v393 = vunpack.c.l.b16 %v105
    %v394 = vunpack.c.l.b16 %v106
    %v395 = vunpack.c.l.b16 %v107
    %v396 = vunpack.c.l.b16 %v108
    %v397 = vunpack.c.l.b16 %v109
    %v398 = vunpack.c.l.b16 %v110
    %v399 = vunpack.c.l.b16 %v111
    %v400 = vunpack.c.l.b16 %v112
    %v401 = vunpack.c.l.b16 %v113
    %v402 = vunpack.c.l.b16 %v114
    %v403 = vunpack.c.l.b16 %v115
    %v404 = vunpack.c.l.b16 %v116
    %v405 = vunpack.c.l.b16 %v117
    %v406 = vunpack.c.l.b16 %v118
    %v407 = vunpack.c.l.b16 %v119
    %v408 = vunpack.c.l.b16 %v120
    %v409 = vunpack.c.l.b16 %v121
    %v410 = vunpack.c.l.b16 %v122
    %v411 = vunpack.c.l.b16 %v123
    %v412 = vunpack.c.l.b16 %v124
    %v413 = vunpack.c.l.b16 %v125
    %v414 = vunpack.c.l.b16 %v126
    %v415 = vunpack.c.l.b16 %v127
    %v416 = vunpack.c.l.b16 %v128
    %v417 = vunpack.c.l.b16 %v129
    %v418 = vunpack.c.l.b16 %v130
    %v419 = vunpack.c.l.b16 %v131
    %v420 = vunpack.c.l.b16 %v132
    %v421 = vpack.c.b16 %v390, %v389
    %v422 = vpack.c.b16 %v392, %v391
    %v423 = vpack.c.b16 %v394, %v393
    %v424 = vpack.c.b16 %v396, %v395
    %v425 = vpack.c.b16 %v398, %v397
    %v426 = vpack.c.b16 %v400, %v399
    %v427 = vpack.c.b16 %v402, %v401
    %v428 = vpack.c.b16 %v404, %v403
    %v429 = vpack.c.b16 %v406, %v405
    %v430 = vpack.c.b16 %v408, %v407
    %v431 = vpack.c.b16 %v410, %v409
    %v432 = vpack.c.b16 %v412, %v411
    %v433 = vpack.c.b16 %v414, %v413
    %v434 = vpack.c.b16 %v416, %v415
    %v435 = vpack.c.b16 %v418, %v417
    %v436 = vpack.c.b16 %v420, %v419
    %453 = vmatprep.subr.bf16.mxu0 0
    %454 = vmatpush1.bf16.msra.mxu0 %v421
    %455 = vmatprep.subr.bf16.mxu0 0
    %456 = vmatpush1.bf16.msra.mxu0 %v422
    %457 = vmatprep.subr.bf16.mxu0 0
    %458 = vmatpush1.bf16.msra.mxu0 %v423
    %459 = vmatprep.subr.bf16.mxu0 0
    %460 = vmatpush1.bf16.msra.mxu0 %v424
    %461 = vmatprep.subr.bf16.mxu0 0
    %462 = vmatpush1.bf16.msra.mxu0 %v425
    %463 = vmatprep.subr.bf16.mxu0 0
    %464 = vmatpush1.bf16.msra.mxu0 %v426
    %465 = vmatprep.subr.bf16.mxu0 0
    %466 = vmatpush1.bf16.msra.mxu0 %v427
    %467 = vmatprep.subr.bf16.mxu0 0
    %468 = vmatpush1.bf16.msra.mxu0 %v428
    %469 = vmatprep.subr.bf16.mxu0 0
    %470 = vmatpush1.bf16.msra.mxu0 %v429
    %471 = vmatprep.subr.bf16.mxu0 0
    %472 = vmatpush1.bf16.msra.mxu0 %v430
    %473 = vmatprep.subr.bf16.mxu0 0
    %474 = vmatpush1.bf16.msra.mxu0 %v431
    %475 = vmatprep.subr.bf16.mxu0 0
    %476 = vmatpush1.bf16.msra.mxu0 %v432
    %477 = vmatprep.subr.bf16.mxu0 0
    %478 = vmatpush1.bf16.msra.mxu0 %v433
    %479 = vmatprep.subr.bf16.mxu0 0
    %480 = vmatpush1.bf16.msra.mxu0 %v434
    %481 = vmatprep.subr.bf16.mxu0 0
    %482 = vmatpush1.bf16.msra.mxu0 %v435
    %483 = vmatprep.subr.bf16.mxu0 0
    %484 = vmatpush1.bf16.msra.mxu0 %v436
    %485 = vmatprep.mubr.bf16.mxu0 %v294
    %486 = vmatmul.mubr.bf16.gmra.mrb[0].mxu0 %v293
    %v487 = vpop.f32.mrb[0].mxu0
    %v488 = vadd.f32 0.0, %v487
    %v489 = vpop.f32.mrb[0].mxu0
    %v490 = vpop.f32.mrb[0].mxu0
    %v491 = vadd.f32 0.0, %v490
    %v492 = vpop.f32.mrb[0].mxu0
    %493 = vmatprep.mubr.bf16.mxu0 %v296
    %494 = vmatmul.mubr.bf16.gmra.mrb[0].mxu0 %v295
    %v495 = vpop.f32.mrb[0].mxu0
    %v496 = vadd.f32 0.0, %v495
    %v497 = vpop.f32.mrb[0].mxu0
    %v498 = vpop.f32.mrb[0].mxu0
    %v499 = vadd.f32 0.0, %v498
    %v500 = vpop.f32.mrb[0].mxu0
    %501 = vmatprep.mubr.bf16.mxu0 %v298
    %502 = vmatmul.mubr.bf16.gmra.mrb[0].mxu0 %v297
    %v503 = vpop.f32.mrb[0].mxu0
    %v504 = vadd.f32 0.0, %v503
    %v505 = vpop.f32.mrb[0].mxu0
    %v506 = vpop.f32.mrb[0].mxu0
    %v507 = vadd.f32 0.0, %v506
    %v508 = vpop.f32.mrb[0].mxu0
    %509 = vmatprep.mubr.bf16.mxu0 %v300
    %510 = vmatmul.mubr.bf16.gmra.mrb[0].mxu0 %v299
    %v511 = vpop.f32.mrb[0].mxu0
    %v512 = vadd.f32 0.0, %v511
    %v513 = vpop.f32.mrb[0].mxu0
    %v514 = vpop.f32.mrb[0].mxu0
    %v515 = vadd.f32 0.0, %v514
    %v516 = vpop.f32.mrb[0].mxu0
    %517 = vmatprep.mubr.bf16.mxu0 %v302
    %518 = vmatmul.mubr.bf16.gmra.mrb[0].mxu0 %v301
    %v519 = vpop.f32.mrb[0].mxu0
    %v520 = vadd.f32 0.0, %v519
    %v521 = vpop.f32.mrb[0].mxu0
    %v522 = vpop.f32.mrb[0].mxu0
    %v523 = vadd.f32 0.0, %v522
    %v524 = vpop.f32.mrb[0].mxu0
    %525 = vmatprep.mubr.bf16.mxu0 %v304
    %526 = vmatmul.mubr.bf16.gmra.mrb[0].mxu0 %v303
    %v527 = vpop.f32.mrb[0].mxu0
    %v528 = vadd.f32 0.0, %v527
    %v529 = vpop.f32.mrb[0].mxu0
    %v530 = vpop.f32.mrb[0].mxu0
    %v531 = vadd.f32 0.0, %v530
    %v532 = vpop.f32.mrb[0].mxu0
    %533 = vmatprep.mubr.bf16.mxu0 %v306
    %534 = vmatmul.mubr.bf16.gmra.mrb[0].mxu0 %v305
    %v535 = vpop.f32.mrb[0].mxu0
    %v536 = vadd.f32 0.0, %v535
    %v537 = vpop.f32.mrb[0].mxu0
    %v538 = vpop.f32.mrb[0].mxu0
    %v539 = vadd.f32 0.0, %v538
    %v540 = vpop.f32.mrb[0].mxu0
    %541 = vmatprep.mubr.bf16.mxu0 %v308
    %542 = vmatmul.mubr.bf16.gmra.mrb[0].mxu0 %v307
    %v543 = vpop.f32.mrb[0].mxu0
    %v544 = vadd.f32 0.0, %v543
    %v545 = vpop.f32.mrb[0].mxu0
    %v546 = vpop.f32.mrb[0].mxu0
    %v547 = vadd.f32 0.0, %v546
    %v548 = vpop.f32.mrb[0].mxu0
    %549 = vmatprep.mubr.bf16.mxu0 %v310
    %550 = vmatmul.mubr.bf16.gmra.mrb[0].mxu0 %v309
    %v551 = vpop.f32.mrb[0].mxu0
    %v552 = vadd.f32 0.0, %v551
    %v553 = vpop.f32.mrb[0].mxu0
    %v554 = vpop.f32.mrb[0].mxu0
    %v555 = vadd.f32 0.0, %v554
    %v556 = vpop.f32.mrb[0].mxu0
    %557 = vmatprep.mubr.bf16.mxu0 %v312
    %558 = vmatmul.mubr.bf16.gmra.mrb[0].mxu0 %v311
    %v559 = vpop.f32.mrb[0].mxu0
    %v560 = vadd.f32 0.0, %v559
    %v561 = vpop.f32.mrb[0].mxu0
    %v562 = vpop.f32.mrb[0].mxu0
    %v563 = vadd.f32 0.0, %v562
    %v564 = vpop.f32.mrb[0].mxu0
    %565 = vmatprep.mubr.bf16.mxu0 %v314
    %566 = vmatmul.mubr.bf16.gmra.mrb[0].mxu0 %v313
    %v567 = vpop.f32.mrb[0].mxu0
    %v568 = vadd.f32 0.0, %v567
    %v569 = vpop.f32.mrb[0].mxu0
    %v570 = vpop.f32.mrb[0].mxu0
    %v571 = vadd.f32 0.0, %v570
    %v572 = vpop.f32.mrb[0].mxu0
    %573 = vmatprep.mubr.bf16.mxu0 %v316
    %574 = vmatmul.mubr.bf16.gmra.mrb[0].mxu0 %v315
    %v575 = vpop.f32.mrb[0].mxu0
    %v576 = vadd.f32 0.0, %v575
    %v577 = vpop.f32.mrb[0].mxu0
    %v578 = vpop.f32.mrb[0].mxu0
    %v579 = vadd.f32 0.0, %v578
    %v580 = vpop.f32.mrb[0].mxu0
    %581 = vmatprep.mubr.bf16.mxu0 %v318
    %582 = vmatmul.mubr.bf16.gmra.mrb[0].mxu0 %v317
    %v583 = vpop.f32.mrb[0].mxu0
    %v584 = vadd.f32 0.0, %v583
    %v585 = vpop.f32.mrb[0].mxu0
    %v586 = vpop.f32.mrb[0].mxu0
    %v587 = vadd.f32 0.0, %v586
    %v588 = vpop.f32.mrb[0].mxu0
    %589 = vmatprep.mubr.bf16.mxu0 %v320
    %590 = vmatmul.mubr.bf16.gmra.mrb[0].mxu0 %v319
    %v591 = vpop.f32.mrb[0].mxu0
    %v592 = vadd.f32 0.0, %v591
    %v593 = vpop.f32.mrb[0].mxu0
    %v594 = vpop.f32.mrb[0].mxu0
    %v595 = vadd.f32 0.0, %v594
    %v596 = vpop.f32.mrb[0].mxu0
    %597 = vmatprep.mubr.bf16.mxu0 %v322
    %598 = vmatmul.mubr.bf16.gmra.mrb[0].mxu0 %v321
    %v599 = vpop.f32.mrb[0].mxu0
    %v600 = vadd.f32 0.0, %v599
    %v601 = vpop.f32.mrb[0].mxu0
    %v602 = vpop.f32.mrb[0].mxu0
    %v603 = vadd.f32 0.0, %v602
    %v604 = vpop.f32.mrb[0].mxu0
    %605 = vmatprep.mubr.bf16.mxu0 %v324
    %606 = vmatmul.mubr.bf16.gmra.mrb[0].mxu0 %v323
    %v607 = vpop.f32.mrb[0].mxu0
    %v608 = vadd.f32 0.0, %v607
    %v609 = vpop.f32.mrb[0].mxu0
    %v610 = vpop.f32.mrb[0].mxu0
    %v611 = vadd.f32 0.0, %v610
    %v612 = vpop.f32.mrb[0].mxu0
    %613 = vdwg.mxu0
    %v614 = vadd.f32 %v133, %v488
    %v615 = vadd.f32 %v134, %v491
    %v616 = vadd.f32 %v135, %v496
    %v617 = vadd.f32 %v136, %v499
    %v618 = vadd.f32 %v137, %v504
    %v619 = vadd.f32 %v138, %v507
    %v620 = vadd.f32 %v139, %v512
    %v621 = vadd.f32 %v140, %v515
    %v622 = vadd.f32 %v141, %v520
    %v623 = vadd.f32 %v142, %v523
    %v624 = vadd.f32 %v143, %v528
    %v625 = vadd.f32 %v144, %v531
    %v626 = vadd.f32 %v145, %v536
    %v627 = vadd.f32 %v146, %v539
    %v628 = vadd.f32 %v147, %v544
    %v629 = vadd.f32 %v148, %v547
    %v630 = vadd.f32 %v149, %v552
    %v631 = vadd.f32 %v150, %v555
    %v632 = vadd.f32 %v151, %v560
    %v633 = vadd.f32 %v152, %v563
    %v634 = vadd.f32 %v153, %v568
    %v635 = vadd.f32 %v154, %v571
    %v636 = vadd.f32 %v155, %v576
    %v637 = vadd.f32 %v156, %v579
    %v638 = vadd.f32 %v157, %v584
    %v639 = vadd.f32 %v158, %v587
    %v640 = vadd.f32 %v159, %v592
    %v641 = vadd.f32 %v160, %v595
    %v642 = vadd.f32 %v161, %v600
    %v643 = vadd.f32 %v162, %v603
    %v644 = vadd.f32 %v163, %v608
    %v645 = vadd.f32 %v164, %v611
    %646 = vst [vmem:[#allocation2] sm:$0xff] %v614
    %647 = vst [vmem:[#allocation2 + $0x8] sm:$0xff] %v615
    %648 = vst [vmem:[#allocation2 + $0x10] sm:$0xff] %v616
    %649 = vst [vmem:[#allocation2 + $0x18] sm:$0xff] %v617
    %650 = vst [vmem:[#allocation2 + $0x20] sm:$0xff] %v618
    %651 = vst [vmem:[#allocation2 + $0x28] sm:$0xff] %v619
    %652 = vst [vmem:[#allocation2 + $0x30] sm:$0xff] %v620
    %653 = vst [vmem:[#allocation2 + $0x38] sm:$0xff] %v621
    %654 = vst [vmem:[#allocation2 + $0x40] sm:$0xff] %v622
    %655 = vst [vmem:[#allocation2 + $0x48] sm:$0xff] %v623
    %656 = vst [vmem:[#allocation2 + $0x50] sm:$0xff] %v624
    %657 = vst [vmem:[#allocation2 + $0x58] sm:$0xff] %v625
    %658 = vst [vmem:[#allocation2 + $0x60] sm:$0xff] %v626
    %659 = vst [vmem:[#allocation2 + $0x68] sm:$0xff] %v627
    %660 = vst [vmem:[#allocation2 + $0x70] sm:$0xff] %v628
    %661 = vst [vmem:[#allocation2 + $0x78] sm:$0xff] %v629
    %662 = vst [vmem:[#allocation2 + $0x80] sm:$0xff] %v630
    %663 = vst [vmem:[#allocation2 + $0x88] sm:$0xff] %v631
    %664 = vst [vmem:[#allocation2 + $0x90] sm:$0xff] %v632
    %665 = vst [vmem:[#allocation2 + $0x98] sm:$0xff] %v633
    %666 = vst [vmem:[#allocation2 + $0xa0] sm:$0xff] %v634
    %667 = vst [vmem:[#allocation2 + $0xa8] sm:$0xff] %v635
    %668 = vst [vmem:[#allocation2 + $0xb0] sm:$0xff] %v636
    %669 = vst [vmem:[#allocation2 + $0xb8] sm:$0xff] %v637
    %670 = vst [vmem:[#allocation2 + $0xc0] sm:$0xff] %v638
    %671 = vst [vmem:[#allocation2 + $0xc8] sm:$0xff] %v639
    %672 = vst [vmem:[#allocation2 + $0xd0] sm:$0xff] %v640
    %673 = vst [vmem:[#allocation2 + $0xd8] sm:$0xff] %v641
    %674 = vst [vmem:[#allocation2 + $0xe0] sm:$0xff] %v642
    %675 = vst [vmem:[#allocation2 + $0xe8] sm:$0xff] %v643
    %676 = vst [vmem:[#allocation2 + $0xf0] sm:$0xff] %v644
    %677 = vst [vmem:[#allocation2 + $0xf8] sm:$0xff] %v645
    // Predicated region
    $region34: #{tpu_custom_call.1} parent=1 // pred_check
      %p678 = pneg %p60
    $region35: #{tpu_custom_call.1} parent=1 // pred_check_branch
      %680 = sbr.rel (%p678) target = $region37
    $region36: #{tpu_custom_call.1} parent=1 // pred_region
      %v681 = vld [vmem:[#allocation2] sm:$0xff]
      %v682 = vld [vmem:[#allocation2 + $0x8] sm:$0xff]
      %v683 = vld [vmem:[#allocation2 + $0x10] sm:$0xff]
      %v684 = vld [vmem:[#allocation2 + $0x18] sm:$0xff]
      %v685 = vld [vmem:[#allocation2 + $0x20] sm:$0xff]
      %v686 = vld [vmem:[#allocation2 + $0x28] sm:$0xff]
      %v687 = vld [vmem:[#allocation2 + $0x30] sm:$0xff]
      %v688 = vld [vmem:[#allocation2 + $0x38] sm:$0xff]
      %v689 = vld [vmem:[#allocation2 + $0x40] sm:$0xff]
      %v690 = vld [vmem:[#allocation2 + $0x48] sm:$0xff]
      %v691 = vld [vmem:[#allocation2 + $0x50] sm:$0xff]
      %v692 = vld [vmem:[#allocation2 + $0x58] sm:$0xff]
      %v693 = vld [vmem:[#allocation2 + $0x60] sm:$0xff]
      %v694 = vld [vmem:[#allocation2 + $0x68] sm:$0xff]
      %v695 = vld [vmem:[#allocation2 + $0x70] sm:$0xff]
      %v696 = vld [vmem:[#allocation2 + $0x78] sm:$0xff]
      %v697 = vld [vmem:[#allocation2 + $0x80] sm:$0xff]
      %v698 = vld [vmem:[#allocation2 + $0x88] sm:$0xff]
      %v699 = vld [vmem:[#allocation2 + $0x90] sm:$0xff]
      %v700 = vld [vmem:[#allocation2 + $0x98] sm:$0xff]
      %v701 = vld [vmem:[#allocation2 + $0xa0] sm:$0xff]
      %v702 = vld [vmem:[#allocation2 + $0xa8] sm:$0xff]
      %v703 = vld [vmem:[#allocation2 + $0xb0] sm:$0xff]
      %v704 = vld [vmem:[#allocation2 + $0xb8] sm:$0xff]
      %v705 = vld [vmem:[#allocation2 + $0xc0] sm:$0xff]
      %v706 = vld [vmem:[#allocation2 + $0xc8] sm:$0xff]
      %v707 = vld [vmem:[#allocation2 + $0xd0] sm:$0xff]
      %v708 = vld [vmem:[#allocation2 + $0xd8] sm:$0xff]
      %v709 = vld [vmem:[#allocation2 + $0xe0] sm:$0xff]
      %v710 = vld [vmem:[#allocation2 + $0xe8] sm:$0xff]
      %v711 = vld [vmem:[#allocation2 + $0xf0] sm:$0xff]
      %v712 = vld [vmem:[#allocation2 + $0xf8] sm:$0xff]
      %v713 = vpack.c.bf16 %v682, %v681
      %v714 = vpack.c.bf16 %v684, %v683
      %v715 = vpack.c.bf16 %v686, %v685
      %v716 = vpack.c.bf16 %v688, %v687
      %v717 = vpack.c.bf16 %v690, %v689
      %v718 = vpack.c.bf16 %v692, %v691
      %v719 = vpack.c.bf16 %v694, %v693
      %v720 = vpack.c.bf16 %v696, %v695
      %v721 = vpack.c.bf16 %v698, %v697
      %v722 = vpack.c.bf16 %v700, %v699
      %v723 = vpack.c.bf16 %v702, %v701
      %v724 = vpack.c.bf16 %v704, %v703
      %v725 = vpack.c.bf16 %v706, %v705
      %v726 = vpack.c.bf16 %v708, %v707
      %v727 = vpack.c.bf16 %v710, %v709
      %v728 = vpack.c.bf16 %v712, %v711
      %v729 = vld [vmem:[#allocation8] sm:$0xf]
      %v730 = vld [vmem:[#allocation8 + $0x4] sm:$0xf]
      %v731 = vld [vmem:[#allocation8 + $0x8] sm:$0xf]
      %v732 = vld [vmem:[#allocation8 + $0xc] sm:$0xf]
      %v733 = vld [vmem:[#allocation8 + $0x10] sm:$0xf]
      %v734 = vld [vmem:[#allocation8 + $0x14] sm:$0xf]
      %v735 = vld [vmem:[#allocation8 + $0x18] sm:$0xf]
      %v736 = vld [vmem:[#allocation8 + $0x1c] sm:$0xf]
      %v737 = vld [vmem:[#allocation8 + $0x20] sm:$0xf]
      %v738 = vld [vmem:[#allocation8 + $0x24] sm:$0xf]
      %v739 = vld [vmem:[#allocation8 + $0x28] sm:$0xf]
      %v740 = vld [vmem:[#allocation8 + $0x2c] sm:$0xf]
      %v741 = vld [vmem:[#allocation8 + $0x30] sm:$0xf]
      %v742 = vld [vmem:[#allocation8 + $0x34] sm:$0xf]
      %v743 = vld [vmem:[#allocation8 + $0x38] sm:$0xf]
      %v744 = vld [vmem:[#allocation8 + $0x3c] sm:$0xf]
      %v745 = vld [vmem:[%s3] sm:$0x1]
      %v747 = vlaneseq
      %v748 = vshrl.u32 %v747, 7
      %v749 = vsub.s32 0, %v748
      %v750 = vrot.slane %v745, %v749
      %v768 = vunpack.c.l.b16 %v729
      %v769 = vunpack.c.l.b16 %v730
      %v770 = vunpack.c.l.b16 %v731
      %v771 = vunpack.c.l.b16 %v732
      %v772 = vunpack.c.l.b16 %v733
      %v773 = vunpack.c.l.b16 %v734
      %v774 = vunpack.c.l.b16 %v735
      %v775 = vunpack.c.l.b16 %v736
      %v776 = vunpack.c.l.b16 %v737
      %v777 = vunpack.c.l.b16 %v738
      %v778 = vunpack.c.l.b16 %v739
      %v779 = vunpack.c.l.b16 %v740
      %v780 = vunpack.c.l.b16 %v741
      %v781 = vunpack.c.l.b16 %v742
      %v782 = vunpack.c.l.b16 %v743
      %v783 = vunpack.c.l.b16 %v744
      %v784 = vpack.c.b16 %v769, %v768
      %v785 = vpack.c.b16 %v771, %v770
      %v786 = vpack.c.b16 %v773, %v772
      %v787 = vpack.c.b16 %v775, %v774
      %v788 = vpack.c.b16 %v777, %v776
      %v789 = vpack.c.b16 %v779, %v778
      %v790 = vpack.c.b16 %v781, %v780
      %v791 = vpack.c.b16 %v783, %v782
      %800 = vmatprep.subr.bf16.mxu0 0
      %801 = vmatpush1.bf16.msra.mxu0 %v784
      %802 = vmatprep.subr.bf16.mxu0 0
      %803 = vmatpush1.bf16.msra.mxu0 %v785
      %804 = vmatprep.subr.bf16.mxu0 0
      %805 = vmatpush1.bf16.msra.mxu0 %v786
      %806 = vmatprep.subr.bf16.mxu0 0
      %807 = vmatpush1.bf16.msra.mxu0 %v787
      %808 = vmatprep.subr.bf16.mxu0 0
      %809 = vmatpush1.bf16.msra.mxu0 %v788
      %810 = vmatprep.subr.bf16.mxu0 0
      %811 = vmatpush1.bf16.msra.mxu0 %v789
      %812 = vmatprep.subr.bf16.mxu0 0
      %813 = vmatpush1.bf16.msra.mxu0 %v790
      %814 = vmatprep.subr.bf16.mxu0 0
      %815 = vmatpush1.bf16.msra.mxu0 %v791
      %816 = vmatprep.subr.bf16.mxu0 0
      %817 = vmatpush1.bf16.msra.mxu0 0
      %818 = vmatprep.subr.bf16.mxu0 0
      %819 = vmatpush1.bf16.msra.mxu0 0
      %820 = vmatprep.subr.bf16.mxu0 0
      %821 = vmatpush1.bf16.msra.mxu0 0
      %822 = vmatprep.subr.bf16.mxu0 0
      %823 = vmatpush1.bf16.msra.mxu0 0
      %824 = vmatprep.subr.bf16.mxu0 0
      %825 = vmatpush1.bf16.msra.mxu0 0
      %826 = vmatprep.subr.bf16.mxu0 0
      %827 = vmatpush1.bf16.msra.mxu0 0
      %828 = vmatprep.subr.bf16.mxu0 0
      %829 = vmatpush1.bf16.msra.mxu0 0
      %830 = vmatprep.subr.bf16.mxu0 0
      %831 = vmatpush1.bf16.msra.mxu0 0
      %832 = vmatprep.mubr.bf16.mxu0 0
      %833 = vmatmul.mubr.bf16.gmra.mrb[0].mxu0 %v713
      %v834 = vpop.f32.mrb[0].mxu0
      %v835 = vadd.f32 %v750, %v834
      %v836 = vpop.f32.mrb[0].mxu0
      %v837 = vpop.f32.mrb[0].mxu0
      %v838 = vadd.f32 %v750, %v837
      %v839 = vpop.f32.mrb[0].mxu0
      %840 = vmatprep.mubr.bf16.mxu0 0
      %841 = vmatmul.mubr.bf16.gmra.mrb[0].mxu0 %v714
      %v842 = vpop.f32.mrb[0].mxu0
      %v843 = vadd.f32 %v750, %v842
      %v844 = vpop.f32.mrb[0].mxu0
      %v845 = vpop.f32.mrb[0].mxu0
      %v846 = vadd.f32 %v750, %v845
      %v847 = vpop.f32.mrb[0].mxu0
      %848 = vmatprep.mubr.bf16.mxu0 0
      %849 = vmatmul.mubr.bf16.gmra.mrb[0].mxu0 %v715
      %v850 = vpop.f32.mrb[0].mxu0
      %v851 = vadd.f32 %v750, %v850
      %v852 = vpop.f32.mrb[0].mxu0
      %v853 = vpop.f32.mrb[0].mxu0
      %v854 = vadd.f32 %v750, %v853
      %v855 = vpop.f32.mrb[0].mxu0
      %856 = vmatprep.mubr.bf16.mxu0 0
      %857 = vmatmul.mubr.bf16.gmra.mrb[0].mxu0 %v716
      %v858 = vpop.f32.mrb[0].mxu0
      %v859 = vadd.f32 %v750, %v858
      %v860 = vpop.f32.mrb[0].mxu0
      %v861 = vpop.f32.mrb[0].mxu0
      %v862 = vadd.f32 %v750, %v861
      %v863 = vpop.f32.mrb[0].mxu0
      %864 = vmatprep.mubr.bf16.mxu0 0
      %865 = vmatmul.mubr.bf16.gmra.mrb[0].mxu0 %v717
      %v866 = vpop.f32.mrb[0].mxu0
      %v867 = vadd.f32 %v750, %v866
      %v868 = vpop.f32.mrb[0].mxu0
      %v869 = vpop.f32.mrb[0].mxu0
      %v870 = vadd.f32 %v750, %v869
      %v871 = vpop.f32.mrb[0].mxu0
      %872 = vmatprep.mubr.bf16.mxu0 0
      %873 = vmatmul.mubr.bf16.gmra.mrb[0].mxu0 %v718
      %v874 = vpop.f32.mrb[0].mxu0
      %v875 = vadd.f32 %v750, %v874
      %v876 = vpop.f32.mrb[0].mxu0
      %v877 = vpop.f32.mrb[0].mxu0
      %v878 = vadd.f32 %v750, %v877
      %v879 = vpop.f32.mrb[0].mxu0
      %880 = vmatprep.mubr.bf16.mxu0 0
      %881 = vmatmul.mubr.bf16.gmra.mrb[0].mxu0 %v719
      %v882 = vpop.f32.mrb[0].mxu0
      %v883 = vadd.f32 %v750, %v882
      %v884 = vpop.f32.mrb[0].mxu0
      %v885 = vpop.f32.mrb[0].mxu0
      %v886 = vadd.f32 %v750, %v885
      %v887 = vpop.f32.mrb[0].mxu0
      %888 = vmatprep.mubr.bf16.mxu0 0
      %889 = vmatmul.mubr.bf16.gmra.mrb[0].mxu0 %v720
      %v890 = vpop.f32.mrb[0].mxu0
      %v891 = vadd.f32 %v750, %v890
      %v892 = vpop.f32.mrb[0].mxu0
      %v893 = vpop.f32.mrb[0].mxu0
      %v894 = vadd.f32 %v750, %v893
      %v895 = vpop.f32.mrb[0].mxu0
      %896 = vmatprep.mubr.bf16.mxu0 0
      %897 = vmatmul.mubr.bf16.gmra.mrb[0].mxu0 %v721
      %v898 = vpop.f32.mrb[0].mxu0
      %v899 = vadd.f32 %v750, %v898
      %v900 = vpop.f32.mrb[0].mxu0
      %v901 = vpop.f32.mrb[0].mxu0
      %v902 = vadd.f32 %v750, %v901
      %v903 = vpop.f32.mrb[0].mxu0
      %904 = vmatprep.mubr.bf16.mxu0 0
      %905 = vmatmul.mubr.bf16.gmra.mrb[0].mxu0 %v722
      %v906 = vpop.f32.mrb[0].mxu0
      %v907 = vadd.f32 %v750, %v906
      %v908 = vpop.f32.mrb[0].mxu0
      %v909 = vpop.f32.mrb[0].mxu0
      %v910 = vadd.f32 %v750, %v909
      %v911 = vpop.f32.mrb[0].mxu0
      %912 = vmatprep.mubr.bf16.mxu0 0
      %913 = vmatmul.mubr.bf16.gmra.mrb[0].mxu0 %v723
      %v914 = vpop.f32.mrb[0].mxu0
      %v915 = vadd.f32 %v750, %v914
      %v916 = vpop.f32.mrb[0].mxu0
      %v917 = vpop.f32.mrb[0].mxu0
      %v918 = vadd.f32 %v750, %v917
      %v919 = vpop.f32.mrb[0].mxu0
      %920 = vmatprep.mubr.bf16.mxu0 0
      %921 = vmatmul.mubr.bf16.gmra.mrb[0].mxu0 %v724
      %v922 = vpop.f32.mrb[0].mxu0
      %v923 = vadd.f32 %v750, %v922
      %v924 = vpop.f32.mrb[0].mxu0
      %v925 = vpop.f32.mrb[0].mxu0
      %v926 = vadd.f32 %v750, %v925
      %v927 = vpop.f32.mrb[0].mxu0
      %928 = vmatprep.mubr.bf16.mxu0 0
      %929 = vmatmul.mubr.bf16.gmra.mrb[0].mxu0 %v725
      %v930 = vpop.f32.mrb[0].mxu0
      %v931 = vadd.f32 %v750, %v930
      %v932 = vpop.f32.mrb[0].mxu0
      %v933 = vpop.f32.mrb[0].mxu0
      %v934 = vadd.f32 %v750, %v933
      %v935 = vpop.f32.mrb[0].mxu0
      %936 = vmatprep.mubr.bf16.mxu0 0
      %937 = vmatmul.mubr.bf16.gmra.mrb[0].mxu0 %v726
      %v938 = vpop.f32.mrb[0].mxu0
      %v939 = vadd.f32 %v750, %v938
      %v940 = vpop.f32.mrb[0].mxu0
      %v941 = vpop.f32.mrb[0].mxu0
      %v942 = vadd.f32 %v750, %v941
      %v943 = vpop.f32.mrb[0].mxu0
      %944 = vmatprep.mubr.bf16.mxu0 0
      %945 = vmatmul.mubr.bf16.gmra.mrb[0].mxu0 %v727
      %v946 = vpop.f32.mrb[0].mxu0
      %v947 = vadd.f32 %v750, %v946
      %v948 = vpop.f32.mrb[0].mxu0
      %v949 = vpop.f32.mrb[0].mxu0
      %v950 = vadd.f32 %v750, %v949
      %v951 = vpop.f32.mrb[0].mxu0
      %952 = vmatprep.mubr.bf16.mxu0 0
      %953 = vmatmul.mubr.bf16.gmra.mrb[0].mxu0 %v728
      %v954 = vpop.f32.mrb[0].mxu0
      %v955 = vadd.f32 %v750, %v954
      %v956 = vpop.f32.mrb[0].mxu0
      %v957 = vpop.f32.mrb[0].mxu0
      %v958 = vadd.f32 %v750, %v957
      %v959 = vpop.f32.mrb[0].mxu0
      %960 = vdwg.mxu0
      %v961 = vmax.f32 %v835, 0.0
      %v962 = vmax.f32 %v838, 0.0
      %v963 = vmax.f32 %v843, 0.0
      %v964 = vmax.f32 %v846, 0.0
      %v965 = vmax.f32 %v851, 0.0
      %v966 = vmax.f32 %v854, 0.0
      %v967 = vmax.f32 %v859, 0.0
      %v968 = vmax.f32 %v862, 0.0
      %v969 = vmax.f32 %v867, 0.0
      %v970 = vmax.f32 %v870, 0.0
      %v971 = vmax.f32 %v875, 0.0
      %v972 = vmax.f32 %v878, 0.0
      %v973 = vmax.f32 %v883, 0.0
      %v974 = vmax.f32 %v886, 0.0
      %v975 = vmax.f32 %v891, 0.0
      %v976 = vmax.f32 %v894, 0.0
      %v977 = vmax.f32 %v899, 0.0
      %v978 = vmax.f32 %v902, 0.0
      %v979 = vmax.f32 %v907, 0.0
      %v980 = vmax.f32 %v910, 0.0
      %v981 = vmax.f32 %v915, 0.0
      %v982 = vmax.f32 %v918, 0.0
      %v983 = vmax.f32 %v923, 0.0
      %v984 = vmax.f32 %v926, 0.0
      %v985 = vmax.f32 %v931, 0.0
      %v986 = vmax.f32 %v934, 0.0
      %v987 = vmax.f32 %v939, 0.0
      %v988 = vmax.f32 %v942, 0.0
      %v989 = vmax.f32 %v947, 0.0
      %v990 = vmax.f32 %v950, 0.0
      %v991 = vmax.f32 %v955, 0.0
      %v992 = vmax.f32 %v958, 0.0
      %v993 = vpack.c.bf16 %v962, %v961
      %v994 = vpack.c.bf16 %v964, %v963
      %v995 = vpack.c.bf16 %v966, %v965
      %v996 = vpack.c.bf16 %v968, %v967
      %v997 = vpack.c.bf16 %v970, %v969
      %v998 = vpack.c.bf16 %v972, %v971
      %v999 = vpack.c.bf16 %v974, %v973
      %v1000 = vpack.c.bf16 %v976, %v975
      %v1001 = vpack.c.bf16 %v978, %v977
      %v1002 = vpack.c.bf16 %v980, %v979
      %v1003 = vpack.c.bf16 %v982, %v981
      %v1004 = vpack.c.bf16 %v984, %v983
      %v1005 = vpack.c.bf16 %v986, %v985
      %v1006 = vpack.c.bf16 %v988, %v987
      %v1007 = vpack.c.bf16 %v990, %v989
      %v1008 = vpack.c.bf16 %v992, %v991
      %v1025 = vunpack.c.l.b16 %v993
      %v1026 = vunpack.c.h.b16 %v993
      %v1027 = vunpack.c.l.b16 %v994
      %v1028 = vunpack.c.h.b16 %v994
      %v1029 = vunpack.c.l.b16 %v995
      %v1030 = vunpack.c.h.b16 %v995
      %v1031 = vunpack.c.l.b16 %v996
      %v1032 = vunpack.c.h.b16 %v996
      %v1033 = vunpack.c.l.b16 %v997
      %v1034 = vunpack.c.h.b16 %v997
      %v1035 = vunpack.c.l.b16 %v998
      %v1036 = vunpack.c.h.b16 %v998
      %v1037 = vunpack.c.l.b16 %v999
      %v1038 = vunpack.c.h.b16 %v999
      %v1039 = vunpack.c.l.b16 %v1000
      %v1040 = vunpack.c.h.b16 %v1000
      %v1041 = vunpack.c.l.b16 %v1001
      %v1042 = vunpack.c.h.b16 %v1001
      %v1043 = vunpack.c.l.b16 %v1002
      %v1044 = vunpack.c.h.b16 %v1002
      %v1045 = vunpack.c.l.b16 %v1003
      %v1046 = vunpack.c.h.b16 %v1003
      %v1047 = vunpack.c.l.b16 %v1004
      %v1048 = vunpack.c.h.b16 %v1004
      %v1049 = vunpack.c.l.b16 %v1005
      %v1050 = vunpack.c.h.b16 %v1005
      %v1051 = vunpack.c.l.b16 %v1006
      %v1052 = vunpack.c.h.b16 %v1006
      %v1053 = vunpack.c.l.b16 %v1007
      %v1054 = vunpack.c.h.b16 %v1007
      %v1055 = vunpack.c.l.b16 %v1008
      %v1056 = vunpack.c.h.b16 %v1008
      %v1057 = vpack.c.b16 %v1025, %v1025
      %v1058 = vpack.c.b16 %v1026, %v1026
      %v1059 = vpack.c.b16 %v1027, %v1027
      %v1060 = vpack.c.b16 %v1028, %v1028
      %v1061 = vpack.c.b16 %v1029, %v1029
      %v1062 = vpack.c.b16 %v1030, %v1030
      %v1063 = vpack.c.b16 %v1031, %v1031
      %v1064 = vpack.c.b16 %v1032, %v1032
      %v1065 = vpack.c.b16 %v1033, %v1033
      %v1066 = vpack.c.b16 %v1034, %v1034
      %v1067 = vpack.c.b16 %v1035, %v1035
      %v1068 = vpack.c.b16 %v1036, %v1036
      %v1069 = vpack.c.b16 %v1037, %v1037
      %v1070 = vpack.c.b16 %v1038, %v1038
      %v1071 = vpack.c.b16 %v1039, %v1039
      %v1072 = vpack.c.b16 %v1040, %v1040
      %v1073 = vpack.c.b16 %v1041, %v1041
      %v1074 = vpack.c.b16 %v1042, %v1042
      %v1075 = vpack.c.b16 %v1043, %v1043
      %v1076 = vpack.c.b16 %v1044, %v1044
      %v1077 = vpack.c.b16 %v1045, %v1045
      %v1078 = vpack.c.b16 %v1046, %v1046
      %v1079 = vpack.c.b16 %v1047, %v1047
      %v1080 = vpack.c.b16 %v1048, %v1048
      %v1081 = vpack.c.b16 %v1049, %v1049
      %v1082 = vpack.c.b16 %v1050, %v1050
      %v1083 = vpack.c.b16 %v1051, %v1051
      %v1084 = vpack.c.b16 %v1052, %v1052
      %v1085 = vpack.c.b16 %v1053, %v1053
      %v1086 = vpack.c.b16 %v1054, %v1054
      %v1087 = vpack.c.b16 %v1055, %v1055
      %v1088 = vpack.c.b16 %v1056, %v1056
      %1121 = vst [vmem:[#allocation9] sm:$0xf] %v1057
      %1122 = vst [vmem:[#allocation9 + $0x4] sm:$0xf] %v1058
      %1123 = vst [vmem:[#allocation9 + $0x8] sm:$0xf] %v1059
      %1124 = vst [vmem:[#allocation9 + $0xc] sm:$0xf] %v1060
      %1125 = vst [vmem:[#allocation9 + $0x10] sm:$0xf] %v1061
      %1126 = vst [vmem:[#allocation9 + $0x14] sm:$0xf] %v1062
      %1127 = vst [vmem:[#allocation9 + $0x18] sm:$0xf] %v1063
      %1128 = vst [vmem:[#allocation9 + $0x1c] sm:$0xf] %v1064
      %1129 = vst [vmem:[#allocation9 + $0x20] sm:$0xf] %v1065
      %1130 = vst [vmem:[#allocation9 + $0x24] sm:$0xf] %v1066
      %1131 = vst [vmem:[#allocation9 + $0x28] sm:$0xf] %v1067
      %1132 = vst [vmem:[#allocation9 + $0x2c] sm:$0xf] %v1068
      %1133 = vst [vmem:[#allocation9 + $0x30] sm:$0xf] %v1069
      %1134 = vst [vmem:[#allocation9 + $0x34] sm:$0xf] %v1070
      %1135 = vst [vmem:[#allocation9 + $0x38] sm:$0xf] %v1071
      %1136 = vst [vmem:[#allocation9 + $0x3c] sm:$0xf] %v1072
      %1137 = vst [vmem:[#allocation9 + $0x40] sm:$0xf] %v1073
      %1138 = vst [vmem:[#allocation9 + $0x44] sm:$0xf] %v1074
      %1139 = vst [vmem:[#allocation9 + $0x48] sm:$0xf] %v1075
      %1140 = vst [vmem:[#allocation9 + $0x4c] sm:$0xf] %v1076
      %1141 = vst [vmem:[#allocation9 + $0x50] sm:$0xf] %v1077
      %1142 = vst [vmem:[#allocation9 + $0x54] sm:$0xf] %v1078
      %1143 = vst [vmem:[#allocation9 + $0x58] sm:$0xf] %v1079
      %1144 = vst [vmem:[#allocation9 + $0x5c] sm:$0xf] %v1080
      %1145 = vst [vmem:[#allocation9 + $0x60] sm:$0xf] %v1081
      %1146 = vst [vmem:[#allocation9 + $0x64] sm:$0xf] %v1082
      %1147 = vst [vmem:[#allocation9 + $0x68] sm:$0xf] %v1083
      %1148 = vst [vmem:[#allocation9 + $0x6c] sm:$0xf] %v1084
      %1149 = vst [vmem:[#allocation9 + $0x70] sm:$0xf] %v1085
      %1150 = vst [vmem:[#allocation9 + $0x74] sm:$0xf] %v1086
      %1151 = vst [vmem:[#allocation9 + $0x78] sm:$0xf] %v1087
      %1152 = vst [vmem:[#allocation9 + $0x7c] sm:$0xf] %v1088
    $region37: #{tpu_custom_call.1} parent=1 // pred_fallthru
      _
    // Predicated region
    $region38: #{tpu_custom_call.1} parent=1 // pred_check
      _
    $region39: #{tpu_custom_call.1} parent=1 // pred_check_branch
      %1154 = sbr.rel (0) target = $region41
    $region40: #{tpu_custom_call.1} parent=1 // pred_region
      %s1156 = ssub.s32 2048, 2048
      %1157 = vsyncadd [#allocation5], %s1156
      %s1158 = sshll.u32 [#allocation9], 4
      %s1159 = int_to_ptr.vmem [resolvable:$true] %s1158
      %1164 = dma.vmem_to_hbm [thread:$0]  %s1159, 2048, %s4, [#allocation5], 64, 64, 4
    $region41: #{tpu_custom_call.1} parent=1 // pred_fallthru
      _
    // Predicated region
    $region42: #{tpu_custom_call.1} parent=1 // pred_check
      _
    $region43: #{tpu_custom_call.1} parent=1 // pred_check_branch
      %1166 = sbr.rel (0) target = $region45
    $region44: #{tpu_custom_call.1} parent=1 // pred_region
      %1167 = dma.done [#allocation5], 2048
    $region45: #{tpu_custom_call.1} parent=1 // pred_fallthru
      _
    %1168 = vsyncpa [#allocation4], 1
    %1169 = vsyncpa [#allocation7], 1
    %1170 = vsyncpa [#allocation5], 1

</llo_original>
